<compile_context>
chip_gen: v5e
topology: v5e:2x2
jax: 0.10.0
libtpu: 0.0.40
codegen_flags: <defaults>
</compile_context>

<pallas_src>
import functools
import numpy as np
import jax
import jax.numpy as jnp
from jax import lax
from jax.experimental import pallas as pl
from jax.experimental.pallas import tpu as pltpu

# ---- constants from the PyTorch module -------------------------------------
LAMBDA_SUM2ONE = 0.5
LAMBDA_BICUBIC = 5.0
LAMBDA_BOUNDARIES = 0.5
LAMBDA_CENTRALIZED = 0.0
LAMBDA_SPARSE = 0.0

BICUBIC_K = np.array(
    [[0.0001373291015625, 0.0004119873046875, -0.0013275146484375, -0.0050811767578125,
      -0.0050811767578125, -0.0013275146484375, 0.0004119873046875, 0.0001373291015625],
     [0.0004119873046875, 0.0012359619140625, -0.0039825439453125, -0.0152435302734375,
      -0.0152435302734375, -0.0039825439453125, 0.0012359619140625, 0.0004119873046875],
     [-0.0013275146484375, -0.003982543945313, 0.0128326416015625, 0.0491180419921875,
      0.0491180419921875, 0.0128326416015625, -0.0039825439453125, -0.0013275146484375],
     [-0.0050811767578125, -0.0152435302734375, 0.0491180419921875, 0.188003540039063,
      0.188003540039063, 0.0491180419921875, -0.0152435302734375, -0.0050811767578125],
     [-0.0050811767578125, -0.0152435302734375, 0.0491180419921875, 0.188003540039063,
      0.188003540039063, 0.0491180419921875, -0.0152435302734375, -0.0050811767578125],
     [-0.001327514648438, -0.0039825439453125, 0.0128326416015625, 0.0491180419921875,
      0.0491180419921875, 0.0128326416015625, -0.0039825439453125, -0.0013275146484375],
     [0.0004119873046875, 0.0012359619140625, -0.0039825439453125, -0.0152435302734375,
      -0.0152435302734375, -0.0039825439453125, 0.0012359619140625, 0.0004119873046875],
     [0.0001373291015625, 0.0004119873046875, -0.0013275146484375, -0.0050811767578125,
      -0.0050811767578125, -0.0013275146484375, 0.0004119873046875, 0.0001373291015625]],
    dtype=np.float32)

# Exact 1-D separable factor of BICUBIC_K (dyadic rationals, exact in f32).
BICUBIC_TAPS = np.array(
    [-0.01171875, -0.03515625, 0.11328125, 0.43359375,
     0.43359375, 0.11328125, -0.03515625, -0.01171875], dtype=np.float32)
assert np.allclose(np.outer(BICUBIC_TAPS, BICUBIC_TAPS), BICUBIC_K, atol=1e-9)


def create_penalty_mask(k_size, penalty_scale):
    """Deterministic re-implementation of KernelGAN's create_penalty_mask."""
    center_size = k_size // 2 + k_size % 2
    zs = np.arange(-k_size // 2 + 1, k_size // 2 + 1, dtype=np.float64)
    sigma = float(k_size)
    func1 = np.exp(-zs ** 2 / (2 * sigma ** 2)) / np.sqrt(2 * np.pi * sigma ** 2)
    mask = np.outer(func1, func1)
    mask = 1.0 - mask / np.max(mask)
    margin = (k_size - center_size) // 2 - 1
    if margin > 0:
        mask[margin:-margin, margin:-margin] = 0.0
    return (penalty_scale * mask).astype(np.float32)


def _build_resize_matrix(n_in, n_out, out_offset, stride, pad, taps):
    """M[r, h]: (M @ x)[r] == 1-D strided conv of zero-padded x, row (out_offset+r)."""
    m = np.zeros((n_out, n_in), np.float32)
    for r in range(n_out):
        start = (out_offset + r) * stride - pad
        for i, t in enumerate(taps):
            h = start + i
            if 0 <= h < n_in:
                m[r, h] += np.float32(t)
    return m


# ---- the Pallas kernel ------------------------------------------------------
def _reg_kernel(x_ref, gp_ref, vt_ref, s_ref, k_ref, mask_ref,
                out_ref, acc_ref, *, n_ch, n_batch, hg, wg, center):
    b = pl.program_id(0)

    @pl.when(b == 0)
    def _init():
        acc_ref[...] = jnp.zeros_like(acc_ref)

    # --- DownScaleLoss: separable bicubic strided conv + shave as two wide
    #     MXU matmuls over a lane-packed block of TB images; the channel sum
    #     of g_input is folded into the first contraction via the tiled VT.
    x = x_ref[...]                                                     # (C*H, TB*W)
    t = jnp.dot(vt_ref[...], x, preferred_element_type=jnp.float32)   # (hg, TB*W)
    ds = jnp.dot(t, s_ref[...], preferred_element_type=jnp.float32)   # (hg, TB*wg)

    gp = gp_ref[...]                                                   # (C, hg, TB*wg)
    diff = gp - ds[None, :, :]
    # Vector accumulator in VMEM; cross-lane reduction deferred to finalize.
    acc_ref[...] = acc_ref[...] + jnp.sum(diff * diff, axis=0)

    # --- finalize: kernel regularizers + weighted sum (last grid step only) --
    @pl.when(b == pl.num_programs(0) - 1)
    def _finalize():
        loss_bicubic = jnp.sum(acc_ref[...]) / jnp.float32(n_batch * n_ch * hg * wg)
        k = k_ref[...]
        loss_boundaries = jnp.mean(jnp.abs(k * mask_ref[...]))   # BoundariesLoss
        loss_sum2one = jnp.abs(1.0 - jnp.sum(k))                 # SumOfWeightsLoss
        reg = (loss_bicubic * LAMBDA_BICUBIC
               + loss_sum2one * LAMBDA_SUM2ONE
               + loss_boundaries * LAMBDA_BOUNDARIES)
        if LAMBDA_CENTRALIZED != 0.0:   # pruned at trace time (lambda == 0)
            ksum = jnp.sum(k)
            r_idx = lax.broadcasted_iota(jnp.float32, k.shape, 0)
            c_idx = lax.broadcasted_iota(jnp.float32, k.shape, 1)
            com_r = jnp.sum(k * r_idx) / ksum
            com_c = jnp.sum(k * c_idx) / ksum
            reg = reg + LAMBDA_CENTRALIZED * 0.5 * ((com_r - center) ** 2
                                                    + (com_c - center) ** 2)
        if LAMBDA_SPARSE != 0.0:        # pruned at trace time (lambda == 0)
            reg = reg + LAMBDA_SPARSE * jnp.mean(jnp.abs(k) ** 0.2)
        out_ref[0, 0] = reg


# ---- wrapper ----------------------------------------------------------------
def downsampler_regularization(curr_k, g_input, g_pred, *, scale_factor=0.5):
    B, C, H, W = g_input.shape
    _, _, hg, wg = g_pred.shape
    K = curr_k.shape[0]
    stride = int(round(1.0 / scale_factor))
    ksz = BICUBIC_TAPS.shape[0]                 # 8
    pad = (ksz - 1) // 2                        # 3 (matches F.conv2d padding)

    ho = (H + 2 * pad - ksz) // stride + 1
    wo = (W + 2 * pad - ksz) // stride + 1
    assert ho >= hg and wo >= wg, "shave_a2b assumes downscaled >= g_pred spatially"
    sr0 = (ho - hg) // 2
    sc0 = (wo - wg) // 2

    # ---- choose how many images per grid step (lane target + VMEM guard) ----
    LANE_TARGET = 512
    tb = max(1, min(B, max(1, LANE_TARGET // max(W, 1))))

    def _step_bytes(tb_):
        x_blk = C * H * tb_ * W
        gp_blk = C * hg * tb_ * wg
        consts = hg * C * H + (tb_ * W) * (tb_ * wg) + 2 * K * K
        return 4 * (2 * (x_blk + gp_blk) + 2 * consts)   # double-buffered f32

    while tb > 1 and _step_bytes(tb) > 24 * 1024 * 1024:
        tb -= 1
    b_pad = -(-B // tb) * tb
    n_blocks = b_pad // tb

    # ---- constants: separable filter + zero pad + stride + shave folded -----
    vt = _build_resize_matrix(H, hg, sr0, stride, pad, BICUBIC_TAPS)       # (hg, H)
    vt_tiled = np.tile(vt, (1, C))                                          # (hg, C*H)
    s_w = _build_resize_matrix(W, wg, sc0, stride, pad, BICUBIC_TAPS).T     # (W, wg)
    s_blk = np.kron(np.eye(tb, dtype=np.float32), s_w)                      # (tb*W, tb*wg)

    # ---- layout plumbing only (no XLA reductions): pack batch into lanes ----
    x = g_input.astype(jnp.float32)
    gp = g_pred.astype(jnp.float32)
    if b_pad != B:   # zero-padded images contribute exactly 0 to the SSE
        x = jnp.pad(x, ((0, b_pad - B), (0, 0), (0, 0), (0, 0)))
        gp = jnp.pad(gp, ((0, b_pad - B), (0, 0), (0, 0), (0, 0)))
    x_packed = (x.reshape(n_blocks, tb, C, H, W)
                 .transpose(0, 2, 3, 1, 4)
                 .reshape(n_blocks, C * H, tb * W))
    gp_packed = (gp.reshape(n_blocks, tb, C, hg, wg)
                  .transpose(0, 2, 3, 1, 4)
                  .reshape(n_blocks, C, hg, tb * wg))

    mask = jnp.asarray(create_penalty_mask(K, 30))
    center = float(K // 2 + 0.5 * (stride - K % 2))

    kern = functools.partial(_reg_kernel, n_ch=C, n_batch=B, hg=hg, wg=wg,
                             center=center)
    out = pl.pallas_call(
        kern,
        out_shape=jax.ShapeDtypeStruct((1, 1), jnp.float32),
        grid_spec=pltpu.PrefetchScalarGridSpec(
            num_scalar_prefetch=0,
            grid=(n_blocks,),
            in_specs=[
                # lane-packed sum-able input block (leading batch-block dim squeezed)
                pl.BlockSpec((None, C * H, tb * W), lambda b: (b, 0, 0)),
                # lane-packed g_pred block
                pl.BlockSpec((None, C, hg, tb * wg), lambda b: (b, 0, 0, 0)),
                pl.BlockSpec((hg, C * H), lambda b: (0, 0)),       # VT tiled (const)
                pl.BlockSpec((tb * W, tb * wg), lambda b: (0, 0)),  # block-diag S (const)
                pl.BlockSpec((K, K), lambda b: (0, 0)),             # curr_k
                pl.BlockSpec((K, K), lambda b: (0, 0)),             # penalty mask
            ],
            out_specs=pl.BlockSpec(memory_space=pltpu.MemorySpace.SMEM),
            scratch_shapes=[pltpu.VMEM((hg, tb * wg), jnp.float32)],  # SSE vector acc
        ),
        compiler_params=pltpu.CompilerParams(
            dimension_semantics=("arbitrary",),       # output accumulated across blocks
            vmem_limit_bytes=32 * 1024 * 1024),
    )(x_packed, gp_packed, jnp.asarray(vt_tiled), jnp.asarray(s_blk),
      curr_k.astype(jnp.float32), mask)
    return out[0, 0]


# ---- pure-JAX reference (for correctness check only) ------------------------
def reference_reg(curr_k, g_input, g_pred, scale_factor=0.5):
    stride = int(round(1.0 / scale_factor))
    C = g_input.shape[1]
    ksz = BICUBIC_K.shape[0]
    pad = (ksz - 1) // 2
    w = jnp.broadcast_to(jnp.asarray(BICUBIC_K)[None, None], (C, C, ksz, ksz))
    dn = lax.conv_general_dilated(g_input, w, (stride, stride),
                                  ((pad, pad), (pad, pad)),
                                  dimension_numbers=('NCHW', 'OIHW', 'NCHW'),
                                  precision=lax.Precision.HIGHEST)
    hg, wg = g_pred.shape[2], g_pred.shape[3]
    sr = max(0, dn.shape[2] - hg)
    sc = max(0, dn.shape[3] - wg)
    dn = dn[:, :, sr // 2: dn.shape[2] - sr + sr // 2,
            sc // 2: dn.shape[3] - sc + sc // 2]
    loss_bicubic = jnp.mean((g_pred - dn) ** 2)

    K = curr_k.shape[0]
    mask = jnp.asarray(create_penalty_mask(K, 30))
    loss_boundaries = jnp.mean(jnp.abs(curr_k * mask))
    ksum = jnp.sum(curr_k)
    loss_sum2one = jnp.abs(1.0 - ksum)
    idx = jnp.arange(K, dtype=jnp.float32)
    r_sum = jnp.sum(curr_k, axis=1)
    c_sum = jnp.sum(curr_k, axis=0)
    center = K // 2 + 0.5 * (stride - K % 2)
    loss_centralized = jnp.mean((jnp.stack([jnp.dot(r_sum, idx) / ksum,
                                            jnp.dot(c_sum, idx) / ksum]) - center) ** 2)
    loss_sparse = jnp.mean(jnp.abs(curr_k) ** 0.2)
    return (loss_bicubic * LAMBDA_BICUBIC + loss_sum2one * LAMBDA_SUM2ONE
            + loss_boundaries * LAMBDA_BOUNDARIES
            + loss_centralized * LAMBDA_CENTRALIZED + loss_sparse * LAMBDA_SPARSE)


if __name__ == "__main__":
    key = jax.random.PRNGKey(0)
    k1, k2, k3 = jax.random.split(key, 3)

    B, C, H, W = 2, 3, 16, 16
    K = 13                       # G_kernel_size
    scale_factor = 0.5           # stride 2 -> downscaled 8x8, g_pred 6x6 (exercises shave)

    g_input = jax.random.normal(k1, (B, C, H, W), jnp.float32)
    g_pred = jax.random.normal(k2, (B, C, 6, 6), jnp.float32)
    curr_k = jax.random.normal(k3, (K, K), jnp.float32) * 0.05 + 1.0 / (K * K)

    reg = downsampler_regularization(curr_k, g_input, g_pred, scale_factor=scale_factor)
    reg = jax.block_until_ready(reg)

    ref = jax.block_until_ready(reference_reg(curr_k, g_input, g_pred, scale_factor))
    np.testing.assert_allclose(np.asarray(reg), np.asarray(ref), rtol=1e-4, atol=1e-5)

    print("KERNEL_OK")
</pallas_src>

<mosaic_0001>
module attributes {stable_mosaic.version = 11 : i64} {
  func.func @_reg_kernel(%arg0: i32, %arg1: memref<1x48x32xf32, #tpu.memory_space<vmem>>, %arg2: memref<1x3x6x12xf32, #tpu.memory_space<vmem>>, %arg3: memref<6x48xf32, #tpu.memory_space<vmem>>, %arg4: memref<32x12xf32, #tpu.memory_space<vmem>>, %arg5: memref<13x13xf32, #tpu.memory_space<vmem>>, %arg6: memref<13x13xf32, #tpu.memory_space<vmem>>, %arg7: memref<1x1xf32, #tpu.memory_space<smem>>, %arg8: memref<6x12xf32, #tpu.memory_space<vmem>>) attributes {dimension_semantics = [#tpu.dimension_semantics<arbitrary>], iteration_bounds = array<i64: 1>, scalar_prefetch = 0 : i64, scratch_operands = 1 : i64, tpu.core_type = #tpu.core_type<tc>, window_params = [{transform_indices = @transform_0, window_bounds = array<i64: 1, 48, 32>}, {transform_indices = @transform_1, window_bounds = array<i64: 1, 3, 6, 12>}, {pipeline_mode = #tpu.pipeline_mode<synchronous>, transform_indices = @transform_2, window_bounds = array<i64: 6, 48>}, {pipeline_mode = #tpu.pipeline_mode<synchronous>, transform_indices = @transform_3, window_bounds = array<i64: 32, 12>}, {pipeline_mode = #tpu.pipeline_mode<synchronous>, transform_indices = @transform_4, window_bounds = array<i64: 13, 13>}, {pipeline_mode = #tpu.pipeline_mode<synchronous>, transform_indices = @transform_5, window_bounds = array<i64: 13, 13>}, {transform_indices = @transform_6, window_bounds = array<i64: 1, 1>}]} {
    %c0_i32 = arith.constant 0 : i32
    %0 = arith.cmpi eq, %arg0, %c0_i32 : i32
    %1 = arith.extui %0 : i1 to i32
    %c0_i32_0 = arith.constant 0 : i32
    %2 = arith.cmpi ne, %1, %c0_i32_0 : i32
    scf.if %2 {
      %cst_19 = arith.constant 0.000000e+00 : f32
      %22 = vector.broadcast %cst_19 : f32 to vector<6x12xf32>
      %c0_20 = arith.constant 0 : index
      %c0_21 = arith.constant 0 : index
      %23 = vector.load %arg8[%c0_20, %c0_21] : memref<6x12xf32, #tpu.memory_space<vmem>>, vector<6x12xf32>
      tpu.vector_store %arg8[%c0_20, %c0_21], %22 {strides = array<i32>} : memref<6x12xf32, #tpu.memory_space<vmem>>, vector<6x12xf32>,
    } else {
    }
    %c0 = arith.constant 0 : index
    %c0_1 = arith.constant 0 : index
    %c0_2 = arith.constant 0 : index
    %3 = vector.load %arg1[%c0, %c0_1, %c0_2] : memref<1x48x32xf32, #tpu.memory_space<vmem>>, vector<1x48x32xf32>
    %4 = vector.shape_cast %3 : vector<1x48x32xf32> to vector<48x32xf32>
    %c0_3 = arith.constant 0 : index
    %c0_4 = arith.constant 0 : index
    %5 = vector.load %arg3[%c0_3, %c0_4] : memref<6x48xf32, #tpu.memory_space<vmem>>, vector<6x48xf32>
    %cst = arith.constant dense<0.000000e+00> : vector<6x32xf32>
    %6 = tpu.matmul %5, %4, %cst {dimension_numbers = #tpu.dot_dimension_numbers<[1], [0], [0], [1], [0, 0, 1, 1], [], []>} : vector<6x48xf32>, vector<48x32xf32>, vector<6x32xf32> -> vector<6x32xf32>
    %c0_5 = arith.constant 0 : index
    %c0_6 = arith.constant 0 : index
    %7 = vector.load %arg4[%c0_5, %c0_6] : memref<32x12xf32, #tpu.memory_space<vmem>>, vector<32x12xf32>
    %cst_7 = arith.constant dense<0.000000e+00> : vector<6x12xf32>
    %8 = tpu.matmul %6, %7, %cst_7 {dimension_numbers = #tpu.dot_dimension_numbers<[1], [0], [0], [1], [0, 0, 1, 1], [], []>} : vector<6x32xf32>, vector<32x12xf32>, vector<6x12xf32> -> vector<6x12xf32>
    %c0_8 = arith.constant 0 : index
    %c0_9 = arith.constant 0 : index
    %c0_10 = arith.constant 0 : index
    %c0_11 = arith.constant 0 : index
    %9 = vector.load %arg2[%c0_8, %c0_9, %c0_10, %c0_11] : memref<1x3x6x12xf32, #tpu.memory_space<vmem>>, vector<1x3x6x12xf32>
    %10 = vector.shape_cast %9 : vector<1x3x6x12xf32> to vector<3x6x12xf32>
    %11 = vector.shape_cast %8 : vector<6x12xf32> to vector<1x6x12xf32>
    %12 = vector.broadcast %11 : vector<1x6x12xf32> to vector<3x6x12xf32>
    %13 = arith.subf %10, %12 : vector<3x6x12xf32>
    %c0_12 = arith.constant 0 : index
    %c0_13 = arith.constant 0 : index
    %14 = vector.load %arg8[%c0_12, %c0_13] : memref<6x12xf32, #tpu.memory_space<vmem>>, vector<6x12xf32>
    %15 = arith.mulf %13, %13 : vector<3x6x12xf32>
    %cst_14 = arith.constant dense<0.000000e+00> : vector<6x12xf32>
    %16 = vector.multi_reduction <add>, %15, %cst_14 [0] : vector<3x6x12xf32> to vector<6x12xf32>
    %17 = arith.addf %14, %16 : vector<6x12xf32>
    %c0_15 = arith.constant 0 : index
    %c0_16 = arith.constant 0 : index
    %18 = vector.load %arg8[%c0_15, %c0_16] : memref<6x12xf32, #tpu.memory_space<vmem>>, vector<6x12xf32>
    tpu.vector_store %arg8[%c0_15, %c0_16], %17 {strides = array<i32>} : memref<6x12xf32, #tpu.memory_space<vmem>>, vector<6x12xf32>,
    %c0_i32_17 = arith.constant 0 : i32
    %19 = arith.cmpi eq, %arg0, %c0_i32_17 : i32
    %20 = arith.extui %19 : i1 to i32
    %c0_i32_18 = arith.constant 0 : i32
    %21 = arith.cmpi ne, %20, %c0_i32_18 : i32
    scf.if %21 {
      %c0_19 = arith.constant 0 : index
      %c0_20 = arith.constant 0 : index
      %22 = vector.load %arg8[%c0_19, %c0_20] : memref<6x12xf32, #tpu.memory_space<vmem>>, vector<6x12xf32>
      %23 = vector.shape_cast %22 : vector<6x12xf32> to vector<1x6x12xf32>
      %cst_21 = arith.constant dense<0.000000e+00> : vector<1xf32>
      %24 = vector.multi_reduction <add>, %23, %cst_21 [1, 2] : vector<1x6x12xf32> to vector<1xf32>
      %25 = vector.shape_cast %24 : vector<1xf32> to vector<1x1x1xf32>
      %26 = vector.extract %25[0, 0, 0] : f32 from vector<1x1x1xf32>
      %cst_22 = arith.constant 2.160000e+02 : f32
      %27 = arith.divf %26, %cst_22 : f32
      %c0_23 = arith.constant 0 : index
      %c0_24 = arith.constant 0 : index
      %28 = vector.load %arg5[%c0_23, %c0_24] : memref<13x13xf32, #tpu.memory_space<vmem>>, vector<13x13xf32>
      %c0_25 = arith.constant 0 : index
      %c0_26 = arith.constant 0 : index
      %29 = vector.load %arg6[%c0_25, %c0_26] : memref<13x13xf32, #tpu.memory_space<vmem>>, vector<13x13xf32>
      %30 = arith.mulf %28, %29 : vector<13x13xf32>
      %31 = math.absf %30 : vector<13x13xf32>
      %32 = vector.shape_cast %31 : vector<13x13xf32> to vector<1x13x13xf32>
      %cst_27 = arith.constant dense<0.000000e+00> : vector<1xf32>
      %33 = vector.multi_reduction <add>, %32, %cst_27 [1, 2] : vector<1x13x13xf32> to vector<1xf32>
      %34 = vector.shape_cast %33 : vector<1xf32> to vector<1x1x1xf32>
      %35 = vector.extract %34[0, 0, 0] : f32 from vector<1x1x1xf32>
      %cst_28 = arith.constant 1.690000e+02 : f32
      %36 = arith.divf %35, %cst_28 : f32
      %37 = vector.shape_cast %28 : vector<13x13xf32> to vector<1x13x13xf32>
      %cst_29 = arith.constant dense<0.000000e+00> : vector<1xf32>
      %38 = vector.multi_reduction <add>, %37, %cst_29 [1, 2] : vector<1x13x13xf32> to vector<1xf32>
      %39 = vector.shape_cast %38 : vector<1xf32> to vector<1x1x1xf32>
      %40 = vector.extract %39[0, 0, 0] : f32 from vector<1x1x1xf32>
      %cst_30 = arith.constant 1.000000e+00 : f32
      %41 = arith.subf %cst_30, %40 : f32
      %42 = math.absf %41 : f32
      %cst_31 = arith.constant 5.000000e+00 : f32
      %43 = arith.mulf %27, %cst_31 : f32
      %cst_32 = arith.constant 5.000000e-01 : f32
      %44 = arith.mulf %42, %cst_32 : f32
      %45 = arith.addf %43, %44 : f32
      %cst_33 = arith.constant 5.000000e-01 : f32
      %46 = arith.mulf %36, %cst_33 : f32
      %47 = arith.addf %45, %46 : f32
      %c0_34 = arith.constant 0 : index
      %c0_35 = arith.constant 0 : index
      %48 = memref.load %arg7[%c0_34, %c0_35] : memref<1x1xf32, #tpu.memory_space<smem>>
      memref.store %47, %arg7[%c0_34, %c0_35] : memref<1x1xf32, #tpu.memory_space<smem>>
    } else {
    }
    return
  }
  func.func @transform_0(%arg0: i32) -> (i32, i32, i32) {
    %c0_i32 = arith.constant 0 : i32
    %c0_i32_0 = arith.constant 0 : i32
    %c0_i32_1 = arith.constant 0 : i32
    return %arg0, %c0_i32, %c0_i32_0 : i32, i32, i32
  }
  func.func @transform_1(%arg0: i32) -> (i32, i32, i32, i32) {
    %c0_i32 = arith.constant 0 : i32
    %c0_i32_0 = arith.constant 0 : i32
    %c0_i32_1 = arith.constant 0 : i32
    %c0_i32_2 = arith.constant 0 : i32
    return %arg0, %c0_i32, %c0_i32_0, %c0_i32_1 : i32, i32, i32, i32
  }
  func.func @transform_2(%arg0: i32) -> (i32, i32) {
    %c0_i32 = arith.constant 0 : i32
    %c0_i32_0 = arith.constant 0 : i32
    %c0_i32_1 = arith.constant 0 : i32
    return %c0_i32, %c0_i32_0 : i32, i32
  }
  func.func @transform_3(%arg0: i32) -> (i32, i32) {
    %c0_i32 = arith.constant 0 : i32
    %c0_i32_0 = arith.constant 0 : i32
    %c0_i32_1 = arith.constant 0 : i32
    return %c0_i32, %c0_i32_0 : i32, i32
  }
  func.func @transform_4(%arg0: i32) -> (i32, i32) {
    %c0_i32 = arith.constant 0 : i32
    %c0_i32_0 = arith.constant 0 : i32
    %c0_i32_1 = arith.constant 0 : i32
    return %c0_i32, %c0_i32_0 : i32, i32
  }
  func.func @transform_5(%arg0: i32) -> (i32, i32) {
    %c0_i32 = arith.constant 0 : i32
    %c0_i32_0 = arith.constant 0 : i32
    %c0_i32_1 = arith.constant 0 : i32
    return %c0_i32, %c0_i32_0 : i32, i32
  }
  func.func @transform_6(%arg0: i32) -> (i32, i32) {
    %c0_i32 = arith.constant 0 : i32
    %c0_i32_0 = arith.constant 0 : i32
    %c0_i32_1 = arith.constant 0 : i32
    return %c0_i32, %c0_i32_0 : i32, i32
  }
}

</mosaic_0001>

<llo_original>
// kernel: tpu_custom_call.1
$region0: #{tpu_custom_call.1}
  #allocation0 [shape = 'u32[]', space=smem, size = 0x4, offset = 0x4, fixed_abs, tag = 'smem constant byte address 0x4 - core index']
  #allocation1 [shape = 'u32[72,128]{1,0:T(1,128)}', space=vmem, size = 0x9000, scoped, tag = 'internal scratch']
  #allocation2 [shape = 'f32[6,12]{1,0:T(8,128)}', space=vmem, size = 0x1000, scoped, tag = 'scratch operand']
  %s0 = inlined_call_operand.vmem [shape: f32[1,48,32], index: 0, kind: input, shape index: {}]
  %s1 = inlined_call_operand.vmem [shape: f32[1,3,6,12], index: 1, kind: input, shape index: {}]
  %s2 = inlined_call_operand.vmem [shape: f32[6,48], index: 2, kind: input, shape index: {}]
  %s3 = inlined_call_operand.vmem [shape: f32[32,12], index: 3, kind: input, shape index: {}]
  %s4 = inlined_call_operand.vmem [shape: f32[13,13], index: 4, kind: input, shape index: {}]
  %s5 = inlined_call_operand.vmem [shape: f32[13,13], index: 5, kind: input, shape index: {}]
  %s6 = inlined_call_operand.hbm [shape: f32[1,1], index: 6, kind: output, shape index: {}]
  %s7 = sld [smem:[#allocation0]]
  $region42: #{tpu_custom_call.1} parent=0
    _
  %s9 = ssub.s32 1, %s7
  %s10 = scalar_select 0, %s9, %s7
  $region1: #{tpu_custom_call.1} parent=0
    #allocation3 [shape = 'u8[512]{0}', space=smem, size = 0x200, scoped, tag = 'output window, operand 0, single buffered']
    #allocation4 [shape = 's32[1]{0}', space=sflag, size = 0x4, scoped, tag = 'scoped memory for tpu_custom_call.1']
    %11 = vsyncpa [#allocation4], 0
    // Predicated region
    $region2: #{tpu_custom_call.1} parent=1 // pred_check
      _
    $region3: #{tpu_custom_call.1} parent=1 // pred_check_branch
      %13 = sbr.rel (0) target = $region5
    $region4: #{tpu_custom_call.1} parent=1 // pred_region
      _
    $region5: #{tpu_custom_call.1} parent=1 // pred_fallthru
      _
    // Predicated region
    $region6: #{tpu_custom_call.1} parent=1 // pred_check
      _
    $region7: #{tpu_custom_call.1} parent=1 // pred_check_branch
      %15 = sbr.rel (0) target = $region9
    $region8: #{tpu_custom_call.1} parent=1 // pred_region
      _
    $region9: #{tpu_custom_call.1} parent=1 // pred_fallthru
      _
    // Predicated region
    $region10: #{tpu_custom_call.1} parent=1 // pred_check
      _
    $region11: #{tpu_custom_call.1} parent=1 // pred_check_branch
      %17 = sbr.rel (0) target = $region13
    $region12: #{tpu_custom_call.1} parent=1 // pred_region
      _
    $region13: #{tpu_custom_call.1} parent=1 // pred_fallthru
      _
    // Predicated region
    $region14: #{tpu_custom_call.1} parent=1 // pred_check
      _
    $region15: #{tpu_custom_call.1} parent=1 // pred_check_branch
      %19 = sbr.rel (0) target = $region17
    $region16: #{tpu_custom_call.1} parent=1 // pred_region
      _
    $region17: #{tpu_custom_call.1} parent=1 // pred_fallthru
      _
    // Predicated region
    $region18: #{tpu_custom_call.1} parent=1 // pred_check
      _
    $region19: #{tpu_custom_call.1} parent=1 // pred_check_branch
      %21 = sbr.rel (0) target = $region21
    $region20: #{tpu_custom_call.1} parent=1 // pred_region
      _
    $region21: #{tpu_custom_call.1} parent=1 // pred_fallthru
      _
    // Predicated region
    $region22: #{tpu_custom_call.1} parent=1 // pred_check
      _
    $region23: #{tpu_custom_call.1} parent=1 // pred_check_branch
      %23 = sbr.rel (0) target = $region25
    $region24: #{tpu_custom_call.1} parent=1 // pred_region
      _
    $region25: #{tpu_custom_call.1} parent=1 // pred_fallthru
      _
    %p24 = scmp.eq.s32.totalorder 0, 0
    // Predicated region
    $region26: #{tpu_custom_call.1} parent=1 // pred_check
      %p25 = pneg %p24
    $region27: #{tpu_custom_call.1} parent=1 // pred_check_branch
      %27 = sbr.rel (%p25) target = $region29
    $region28: #{tpu_custom_call.1} parent=1 // pred_region
      %vm28 = vcmask 95232
      %29 = vst.msk [vmem:[#allocation2] sm:$0x3f] %vm28, 0.0
    $region29: #{tpu_custom_call.1} parent=1 // pred_fallthru
      _
    %v30 = vld [vmem:[%s0] sm:$0xff]
    %v31 = vld [vmem:[%s0 + $0x8] sm:$0xff]
    %v32 = vld [vmem:[%s0 + $0x10] sm:$0xff]
    %v33 = vld [vmem:[%s0 + $0x18] sm:$0xff]
    %v34 = vld [vmem:[%s0 + $0x20] sm:$0xff]
    %v35 = vld [vmem:[%s0 + $0x28] sm:$0xff]
    %v36 = vld [vmem:[%s2] sm:$0x3f]
    %vm37 = vcmask 392192
    %v39 = vsel %vm37, %v36, 0
    %41 = vmatpush.msra.mxu0 0.0
    %42 = vmatpush.msra.mxu0 0.0
    %43 = vmatpush.msra.mxu0 0.0
    %44 = vmatpush.msra.mxu0 0.0
    %45 = vmatpush.msra.mxu0 0.0
    %46 = vmatpush.msra.mxu0 0.0
    %47 = vmatpush.msra.mxu0 0.0
    %48 = vmatpush.msra.mxu0 0.0
    %49 = vmatpush.msra.mxu0 0.0
    %50 = vmatpush.msra.mxu0 0.0
    %51 = vmatpush.msra.mxu0 %v35
    %52 = vmatpush.msra.mxu0 %v34
    %53 = vmatpush.msra.mxu0 %v33
    %54 = vmatpush.msra.mxu0 %v32
    %55 = vmatpush.msra.mxu0 %v31
    %56 = vmatpush.msra.mxu0 %v30
    %57 = vmatmul.f32.gmra.mxu0 %v39
    %v58 = vpop.f32.mrf.mxu0
    %v59 = vadd.f32 0.0, %v58
    %60 = vdwg.mxu0
    %v61 = vld [vmem:[%s3] sm:$0xff]
    %v62 = vld [vmem:[%s3 + $0x8] sm:$0xff]
    %v63 = vld [vmem:[%s3 + $0x10] sm:$0xff]
    %v64 = vld [vmem:[%s3 + $0x18] sm:$0xff]
    %vm65 = vcmask 261120
    %v67 = vsel %vm65, %v59, 0
    %69 = vmatpush.msra.mxu0 0.0
    %70 = vmatpush.msra.mxu0 0.0
    %71 = vmatpush.msra.mxu0 0.0
    %72 = vmatpush.msra.mxu0 0.0
    %73 = vmatpush.msra.mxu0 0.0
    %74 = vmatpush.msra.mxu0 0.0
    %75 = vmatpush.msra.mxu0 0.0
    %76 = vmatpush.msra.mxu0 0.0
    %77 = vmatpush.msra.mxu0 0.0
    %78 = vmatpush.msra.mxu0 0.0
    %79 = vmatpush.msra.mxu0 0.0
    %80 = vmatpush.msra.mxu0 0.0
    %81 = vmatpush.msra.mxu0 %v64
    %82 = vmatpush.msra.mxu0 %v63
    %83 = vmatpush.msra.mxu0 %v62
    %84 = vmatpush.msra.mxu0 %v61
    %85 = vmatmul.f32.gmra.mxu0 %v67
    %v86 = vpop.f32.mrf.mxu0
    %v87 = vadd.f32 0.0, %v86
    %88 = vdwg.mxu0
    %v89 = vld [vmem:[%s1] sm:$0x3f]
    %v90 = vld [vmem:[%s1 + $0x8] sm:$0x3f]
    %v91 = vld [vmem:[%s1 + $0x10] sm:$0x3f]
    %v92 = vsub.f32 %v89, %v87
    %v93 = vsub.f32 %v90, %v87
    %v94 = vsub.f32 %v91, %v87
    %v95 = vld [vmem:[#allocation2] sm:$0x3f]
    %v96 = vmul.f32 %v92, %v92
    %v97 = vmul.f32 %v93, %v93
    %v98 = vmul.f32 %v94, %v94
    %vm99 = vcmask 95232
    %v100 = vsel %vm99, %v96, 0.0
    %v101 = vsel %vm99, %v97, 0.0
    %v102 = vadd.f32 %v100, %v101
    %v103 = vsel %vm99, %v98, 0.0
    %v104 = vadd.f32 %v102, %v103
    %v105 = vadd.f32 %v95, %v104
    %106 = vst.msk [vmem:[#allocation2] sm:$0x3f] %vm99, %v105
    // Predicated region
    $region30: #{tpu_custom_call.1} parent=1 // pred_check
      %p107 = pneg %p24
    $region31: #{tpu_custom_call.1} parent=1 // pred_check_branch
      %109 = sbr.rel (%p107) target = $region33
    $region32: #{tpu_custom_call.1} parent=1 // pred_region
      %v110 = vld [vmem:[#allocation2] sm:$0x3f]
      %v111 = vsel %vm99, %v110, 0.0
      %112 = vadd.xlane.f32.xlu0 %v111
      %v113 = vpop.xlane.xlu0 %112
      %v114 = vrot.slane %v113, 4
      %v115 = vadd.f32 %v113, %v114
      %v116 = vrot.slane %v115, 2
      %v117 = vadd.f32 %v115, %v116
      %v118 = vrot.slane %v117, 1
      %v119 = vadd.f32 %v117, %v118
      %s120 = vtos %v119
      %v121 = vrcp.pop 216.0
      %v122 = vmul.f32 216.0, %v121
      %v123 = vsub.f32 1.0, %v122
      %v124 = vmul.f32 %v121, %v123
      %v125 = vadd.f32 %v121, %v124
      %vm126 = vweird.f32 %v121
      %v127 = vsel %vm126, %v121, %v125
      %s128 = vtos %v127
      %s129 = smul.f32 %s120, %s128
      %v130 = vld [vmem:[%s4] sm:$0xff]
      %v131 = vld [vmem:[%s4 + $0x8] sm:$0x1f]
      %v132 = vld [vmem:[%s5] sm:$0xff]
      %v133 = vld [vmem:[%s5 + $0x8] sm:$0x1f]
      %v134 = vmul.f32 %v130, %v132
      %v135 = vmul.f32 %v131, %v133
      %v136 = vand.u32 2147483647, %v134
      %v137 = vand.u32 2147483647, %v135
      %vm138 = vcmask 105472
      %v139 = vsel %vm138, %v136, 0.0
      %vm140 = vcmask 102400
      %v141 = vsel %vm140, %v137, 0.0
      %v142 = vadd.f32 %v139, %v141
      %143 = vadd.xlane.f32.xlu0 %v142
      %v144 = vpop.xlane.xlu0 %143
      %v145 = vrot.slane %v144, 4
      %v146 = vadd.f32 %v144, %v145
      %v147 = vrot.slane %v146, 2
      %v148 = vadd.f32 %v146, %v147
      %v149 = vrot.slane %v148, 1
      %v150 = vadd.f32 %v148, %v149
      %s151 = vtos %v150
      %v152 = vrcp.pop 169.0
      %v153 = vmul.f32 169.0, %v152
      %v154 = vsub.f32 1.0, %v153
      %v155 = vmul.f32 %v152, %v154
      %v156 = vadd.f32 %v152, %v155
      %vm157 = vweird.f32 %v152
      %v158 = vsel %vm157, %v152, %v156
      %s159 = vtos %v158
      %s160 = smul.f32 %s151, %s159
      %v161 = vsel %vm138, %v130, 0.0
      %v162 = vsel %vm140, %v131, 0.0
      %v163 = vadd.f32 %v161, %v162
      %164 = vadd.xlane.f32.xlu0 %v163
      %v165 = vpop.xlane.xlu0 %164
      %v166 = vrot.slane %v165, 4
      %v167 = vadd.f32 %v165, %v166
      %v168 = vrot.slane %v167, 2
      %v169 = vadd.f32 %v167, %v168
      %v170 = vrot.slane %v169, 1
      %v171 = vadd.f32 %v169, %v170
      %s172 = vtos %v171
      %s173 = ssub.f32 1.0, %s172
      %s174 = sand.u32 2147483647, %s173
      %s175 = smul.f32 %s129, 5.0
      %s176 = smul.f32 %s174, 0.5
      %s177 = sadd.f32 %s175, %s176
      %s178 = smul.f32 %s160, 0.5
      %s179 = sadd.f32 %s177, %s178
      %s180 = scalar_lea.smem [#allocation3], 0
      %181 = sst [smem:[%s180]] %s179
    $region33: #{tpu_custom_call.1} parent=1 // pred_fallthru
      _
    // Predicated region
    $region34: #{tpu_custom_call.1} parent=1 // pred_check
      _
    $region35: #{tpu_custom_call.1} parent=1 // pred_check_branch
      %183 = sbr.rel (0) target = $region37
    $region36: #{tpu_custom_call.1} parent=1 // pred_region
      %185 = vsyncadd [#allocation4], 0
      %s187 = sshll.u32 %s6, 4
      %s188 = int_to_ptr.hbm [resolvable:$true] %s187
      %190 = dma.smem_to_hbm [#allocation3], 16, %s188, [#allocation4]
    $region37: #{tpu_custom_call.1} parent=1 // pred_fallthru
      _
    // Predicated region
    $region38: #{tpu_custom_call.1} parent=1 // pred_check
      _
    $region39: #{tpu_custom_call.1} parent=1 // pred_check_branch
      %192 = sbr.rel (0) target = $region41
    $region40: #{tpu_custom_call.1} parent=1 // pred_region
      %194 = dma.done [#allocation4], 16
    $region41: #{tpu_custom_call.1} parent=1 // pred_fallthru
      _
    %195 = sfence
    %196 = vsyncpa [#allocation4], 1

</llo_original>
